<compile_context>
chip_gen: v5e
topology: v5e:2x2
jax: 0.10.0
libtpu: 0.0.40
codegen_flags: <defaults>
</compile_context>

<pallas_src>
import functools

import numpy as np
import jax
import jax.numpy as jnp
from jax.experimental import pallas as pl
from jax.experimental.pallas import tpu as pltpu

# Halo margins of the padded spatial grid.  _ROFF pads H, _COFF pads W;
# _COFF=8 makes the padded width 32 so the flattened padded spatial extent
# (H+4)*(W+16) = 20*32 = 640 is an exact multiple of 128 lanes.
_ROFF = 2
_COFF = 8


@functools.lru_cache(maxsize=None)
def _roll_matches_numpy() -> bool:
    """Probe pltpu.roll's shift convention once with a tiny kernel.

    Returns True if pltpu.roll(x, s) == np.roll(x, s) (element 0 moves to
    index s).  The main kernel picks the tap-shift sign accordingly, so the
    conv taps are correct under either convention.
    """
    def k(x_ref, o_ref):
        o_ref[...] = pltpu.roll(x_ref[...], 1, 1)

    x = jnp.arange(8 * 128, dtype=jnp.float32).reshape(8, 128)
    out = pl.pallas_call(
        k, out_shape=jax.ShapeDtypeStruct((8, 128), jnp.float32))(x)
    return bool(np.asarray(out)[0, 0] == 127.0)   # np.roll: out[0,0] == x[0,-1]


def _fused_conv_relu_kernel(mask_ref, x_ref,
                            w1_ref, b1_ref, w2_ref, b2_ref,
                            w3_ref, b3_ref, w4_ref, b4_ref,
                            o_ref, patch_ref,
                            *, pc, sp, c1, c2, shift_sign):
    f32 = jnp.float32
    mask = mask_ref[...]                       # (1, sp): 1.0 interior, 0.0 halo

    # ---- conv1: 1x1, 3->16, + ReLU, computed over all 640 padded columns ----
    y1 = jnp.dot(w1_ref[...], x_ref[0], preferred_element_type=f32)   # (16, sp)
    y1 = jnp.maximum(y1 + b1_ref[...], 0.0) * mask   # mask re-zeroes the halo

    # ---- conv2: 3x3 (pad 1), 16->16: 9 rolled taps -> one K=144 matmul ------
    for kh in range(3):
        for kw in range(3):
            t = kh * 3 + kw
            delta = (kh - 1) * pc + (kw - 1)          # tap[i] = y1[i + delta]
            tap = y1 if delta == 0 else pltpu.roll(y1, (shift_sign * delta) % sp, 1)
            patch_ref[t * c1:(t + 1) * c1, :] = tap
    y2 = jnp.dot(w2_ref[...], patch_ref[0:9 * c1, :],
                 preferred_element_type=f32)                          # (16, sp)
    y2 = jnp.maximum(y2 + b2_ref[...], 0.0) * mask

    # ---- conv3: 5x5 (pad 2), 16->32: 25 rolled taps -> one K=400 matmul -----
    for kh in range(5):
        for kw in range(5):
            t = kh * 5 + kw
            delta = (kh - 2) * pc + (kw - 2)
            tap = y2 if delta == 0 else pltpu.roll(y2, (shift_sign * delta) % sp, 1)
            patch_ref[t * c2:(t + 1) * c2, :] = tap
    y3 = jnp.dot(w3_ref[...], patch_ref[...], preferred_element_type=f32)
    y3 = jnp.maximum(y3 + b3_ref[...], 0.0)     # (32, sp); halo garbage is fine
                                                # (discarded by the final slice)

    # ---- conv4: 1x1, 32->64, + ReLU; lane-dense (64, 640) output store ------
    y4 = jnp.dot(w4_ref[...], y3, preferred_element_type=f32)
    o_ref[0] = jnp.maximum(y4 + b4_ref[...], 0.0)


def model_forward(x_nchw, params):
    """Runs the whole 4-layer conv+ReLU stack in one fused Pallas kernel."""
    N, cin, H, W = x_nchw.shape
    (w1, b1), (w2, b2), (w3, b3), (w4, b4) = params
    c1, c2, c3, c4 = w1.shape[-1], w2.shape[-1], w3.shape[-1], w4.shape[-1]

    pr, pc = H + 2 * _ROFF, W + 2 * _COFF
    sp = pr * pc                               # 640 = 5 * 128 (lane dense)
    cin_p = 8                                  # pad Cin 3 -> 8 (one sublane tile)

    # Input: channel-major, zero-padded spatial flattened onto lanes.
    xp = jnp.pad(x_nchw,
                 ((0, 0), (0, cin_p - cin), (_ROFF, _ROFF), (_COFF, _COFF)))
    xp = xp.reshape(N, cin_p, sp)

    # Interior mask (1, sp): 1.0 at valid pixels, 0.0 in the halo.
    mk = jnp.zeros((pr, pc), jnp.float32)
    mk = mk.at[_ROFF:_ROFF + H, _COFF:_COFF + W].set(1.0).reshape(1, sp)

    # Kernel-friendly (Cout, K) weight layouts; conv2/conv3 in im2col form.
    w1k = jnp.pad(w1.reshape(cin, c1), ((0, cin_p - cin), (0, 0))).T   # (16, 8)
    w2k = w2.reshape(9 * c1, c2).T                                     # (16, 144)
    w3k = w3.reshape(25 * c2, c3).T                                    # (32, 400)
    w4k = w4.reshape(c3, c4).T                                         # (64, 32)
    b1k = b1.reshape(c1, 1)
    b2k = b2.reshape(c2, 1)
    b3k = b3.reshape(c3, 1)
    b4k = b4.reshape(c4, 1)

    shift_sign = -1 if _roll_matches_numpy() else 1
    kernel = functools.partial(_fused_conv_relu_kernel,
                               pc=pc, sp=sp, c1=c1, c2=c2,
                               shift_sign=shift_sign)

    # NOTE: for large batches, fold several images per grid step to amortise
    # the per-step overhead; at N=2 one image per step is enough.
    out = pl.pallas_call(
        kernel,
        out_shape=jax.ShapeDtypeStruct((N, c4, sp), jnp.float32),
        grid=(N,),
        in_specs=[
            pl.BlockSpec((1, sp), lambda n: (0, 0)),              # halo mask
            pl.BlockSpec((1, cin_p, sp), lambda n: (n, 0, 0)),    # input image
            pl.BlockSpec(w1k.shape, lambda n: (0, 0)),
            pl.BlockSpec(b1k.shape, lambda n: (0, 0)),
            pl.BlockSpec(w2k.shape, lambda n: (0, 0)),
            pl.BlockSpec(b2k.shape, lambda n: (0, 0)),
            pl.BlockSpec(w3k.shape, lambda n: (0, 0)),
            pl.BlockSpec(b3k.shape, lambda n: (0, 0)),
            pl.BlockSpec(w4k.shape, lambda n: (0, 0)),
            pl.BlockSpec(b4k.shape, lambda n: (0, 0)),
        ],
        out_specs=pl.BlockSpec((1, c4, sp), lambda n: (n, 0, 0)),
        scratch_shapes=[
            pltpu.VMEM((25 * c2, sp), jnp.float32),   # im2col patches (<= 1 MiB)
        ],
        compiler_params=pltpu.CompilerParams(
            dimension_semantics=("parallel",)),
    )(mk, xp, w1k, b1k, w2k, b2k, w3k, b3k, w4k, b4k)

    # Cheap XLA slice: drop the halo columns -> NCHW.
    out = out.reshape(N, c4, pr, pc)[:, :, _ROFF:_ROFF + H, _COFF:_COFF + W]
    return out


def init_conv_params(key, kh, kw, cin, cout):
    # Deterministic PyTorch-ish init: U(-1/sqrt(fan_in), 1/sqrt(fan_in)).
    kw_key, b_key = jax.random.split(key)
    bound = 1.0 / jnp.sqrt(float(cin * kh * kw))
    w = jax.random.uniform(kw_key, (kh, kw, cin, cout), jnp.float32,
                           minval=-bound, maxval=bound)
    b = jax.random.uniform(b_key, (cout,), jnp.float32,
                           minval=-bound, maxval=bound)
    return w, b


def reference_forward(x_nchw, params):
    # Pure-JAX reference (lax conv) for a correctness cross-check.
    x = x_nchw
    for (w, b), pad in zip(params, (0, 1, 2, 0)):
        w_oihw = jnp.transpose(w, (3, 2, 0, 1))   # (KH,KW,Cin,Cout) -> OIHW
        x = jax.lax.conv_general_dilated(
            x, w_oihw, window_strides=(1, 1),
            padding=((pad, pad), (pad, pad)),
            dimension_numbers=("NCHW", "OIHW", "NCHW"))
        x = jnp.maximum(x + b[None, :, None, None], 0.0)
    return x


if __name__ == "__main__":
    key = jax.random.PRNGKey(0)
    kx, k1, k2, k3, k4 = jax.random.split(key, 5)

    # Small input consistent with the module: conv1 requires 3 input channels.
    x = jax.random.normal(kx, (2, 3, 16, 16), jnp.float32)  # NCHW

    params = (
        init_conv_params(k1, 1, 1, 3, 16),
        init_conv_params(k2, 3, 3, 16, 16),
        init_conv_params(k3, 5, 5, 16, 32),
        init_conv_params(k4, 1, 1, 32, 64),
    )

    _roll_matches_numpy()          # run the tiny probe once, before tracing
    fwd = jax.jit(model_forward)
    out = jax.block_until_ready(fwd(x, params))

    ref = jax.block_until_ready(reference_forward(x, params))
    assert out.shape == (2, 64, 16, 16), out.shape
    assert jnp.allclose(out, ref, rtol=1e-4, atol=1e-4), "mismatch vs reference"

    print("KERNEL_OK")
</pallas_src>

<mosaic_0001>
module attributes {stable_mosaic.version = 11 : i64} {
  func.func @k(%arg0: memref<8x128xf32, #tpu.memory_space<vmem>>, %arg1: memref<8x128xf32, #tpu.memory_space<vmem>>) attributes {dimension_semantics = [], scalar_prefetch = 0 : i64, scratch_operands = 0 : i64, tpu.core_type = #tpu.core_type<tc>} {
    %c0 = arith.constant 0 : index
    %c0_0 = arith.constant 0 : index
    %0 = vector.load %arg0[%c0, %c0_0] : memref<8x128xf32, #tpu.memory_space<vmem>>, vector<8x128xf32>
    %c1_i32 = arith.constant 1 : i32
    %1 = tpu.dynamic_rotate %0 by %c1_i32 dim 1 : vector<8x128xf32>, i32 -> vector<8x128xf32>
    %c0_1 = arith.constant 0 : index
    %c0_2 = arith.constant 0 : index
    %2 = vector.load %arg1[%c0_1, %c0_2] : memref<8x128xf32, #tpu.memory_space<vmem>>, vector<8x128xf32>
    tpu.vector_store %arg1[%c0_1, %c0_2], %1 {strides = array<i32>} : memref<8x128xf32, #tpu.memory_space<vmem>>, vector<8x128xf32>,
    return
  }
}

</mosaic_0001>

<llo_original>
// kernel: tpu_custom_call.1
$region0: #{tpu_custom_call.1}
  #allocation0 [shape = 'u32[]', space=smem, size = 0x4, offset = 0x4, fixed_abs, tag = 'smem constant byte address 0x4 - core index']
  #allocation1 [shape = 'u32[72,128]{1,0:T(1,128)}', space=vmem, size = 0x9000, scoped, tag = 'internal scratch']
  %s0 = inlined_call_operand.hbm [shape: f32[8,128], index: 0, kind: input, shape index: {}]
  %s1 = inlined_call_operand.hbm [shape: f32[8,128], index: 1, kind: output, shape index: {}]
  %s2 = sld [smem:[#allocation0]]
  $region18: #{tpu_custom_call.1} parent=0
    _
  %s4 = ssub.s32 1, %s2
  %s5 = scalar_select 0, %s4, %s2
  $region1: #{tpu_custom_call.1} parent=0
    #allocation2 [shape = 'u8[4096]{0}', space=vmem, size = 0x1000, scoped, tag = 'input window, operand 0, single buffered']
    #allocation3 [shape = 's32[1]{0}', space=sflag, size = 0x4, scoped, tag = 'scoped memory for tpu_custom_call.1']
    #allocation4 [shape = 's32[1]{0}', space=sflag, size = 0x4, scoped, tag = 'scoped memory for tpu_custom_call.1']
    #allocation5 [shape = 'u8[4096]{0}', space=vmem, size = 0x1000, scoped, tag = 'output window, operand 0, single buffered']
    %6 = vsyncpa [#allocation3], 0
    %7 = vsyncpa [#allocation4], 0
    // Predicated region
    $region2: #{tpu_custom_call.1} parent=1 // pred_check
      _
    $region3: #{tpu_custom_call.1} parent=1 // pred_check_branch
      %9 = sbr.rel (0) target = $region5
    $region4: #{tpu_custom_call.1} parent=1 // pred_region
      %11 = vsyncadd [#allocation3], 0
      %s13 = sshll.u32 %s0, 4
      %s14 = int_to_ptr.hbm [resolvable:$true] %s13
      %s15 = sshll.u32 [#allocation2], 4
      %s16 = int_to_ptr.vmem [resolvable:$true] %s15
      %18 = dma.hbm_to_vmem [thread:$0]  %s14, 128, %s16, [#allocation3]
    $region5: #{tpu_custom_call.1} parent=1 // pred_fallthru
      _
    // Predicated region
    $region6: #{tpu_custom_call.1} parent=1 // pred_check
      _
    $region7: #{tpu_custom_call.1} parent=1 // pred_check_branch
      %20 = sbr.rel (0) target = $region9
    $region8: #{tpu_custom_call.1} parent=1 // pred_region
      %22 = dma.done [#allocation3], 128
    $region9: #{tpu_custom_call.1} parent=1 // pred_fallthru
      _
    %v23 = vld [vmem:[#allocation2] sm:$0xff]
    %24 = vrot.lane.b32.xlu0 %v23, 1
    %v25 = vpop.permute.xlu0 %24
    %26 = vst [vmem:[#allocation5] sm:$0xff] %v25
    // Predicated region
    $region10: #{tpu_custom_call.1} parent=1 // pred_check
      _
    $region11: #{tpu_custom_call.1} parent=1 // pred_check_branch
      %28 = sbr.rel (0) target = $region13
    $region12: #{tpu_custom_call.1} parent=1 // pred_region
      %30 = vsyncadd [#allocation4], 0
      %s32 = sshll.u32 [#allocation5], 4
      %s33 = int_to_ptr.vmem [resolvable:$true] %s32
      %s34 = sshll.u32 %s1, 4
      %s35 = int_to_ptr.hbm [resolvable:$true] %s34
      %37 = dma.vmem_to_hbm [thread:$0]  %s33, 128, %s35, [#allocation4]
    $region13: #{tpu_custom_call.1} parent=1 // pred_fallthru
      _
    // Predicated region
    $region14: #{tpu_custom_call.1} parent=1 // pred_check
      _
    $region15: #{tpu_custom_call.1} parent=1 // pred_check_branch
      %39 = sbr.rel (0) target = $region17
    $region16: #{tpu_custom_call.1} parent=1 // pred_region
      %41 = dma.done [#allocation4], 128
    $region17: #{tpu_custom_call.1} parent=1 // pred_fallthru
      _
    %42 = vsyncpa [#allocation3], 1
    %43 = vsyncpa [#allocation4], 1

</llo_original>
